<compile_context>
chip_gen: v5e
topology: v5e:2x2
jax: 0.10.0
libtpu: 0.0.40
codegen_flags: <defaults>
</compile_context>

<pallas_src>
import functools
import math

import jax
import jax.numpy as jnp
from jax.experimental import pallas as pl
from jax.experimental.pallas import tpu as pltpu


def _grn_kernel(gamma_ref, beta_ref, x_ref, o_ref, *, eps: float):
    """One batch element per grid step.

    gamma_ref: VMEM (1, C)
    beta_ref : VMEM (1, C)
    x_ref    : VMEM (1, HW, C)
    o_ref    : VMEM (1, HW, C)
    """
    x = x_ref[...].astype(jnp.float32)                    # (1, HW, C)

    # Gx = L2 norm over the spatial (HW) axis, per channel.
    sumsq = jnp.sum(x * x, axis=1, keepdims=True)         # (1, 1, C)
    gx = jnp.sqrt(sumsq)                                  # (1, 1, C)

    # Nx = Gx / (mean over channels + eps)
    nx = gx / (jnp.mean(gx, axis=-1, keepdims=True) + eps)  # (1, 1, C)

    gamma = gamma_ref[...].astype(jnp.float32)[None]      # (1, 1, C)
    beta = beta_ref[...].astype(jnp.float32)[None]        # (1, 1, C)

    out = gamma * (x * nx) + beta + x                     # (1, HW, C), f32
    o_ref[...] = out.astype(o_ref.dtype)


def grn_pallas(x, gamma, beta, eps: float = 1e-6):
    """Apply GRN to x of shape (B, H, W, C); gamma/beta of shape (1, 1, 1, C)."""
    B, H, W, C = x.shape
    HW = H * W

    xr = x.reshape(B, HW, C)                       # free reshape, no copy
    g = gamma.reshape(1, C).astype(jnp.float32)
    b = beta.reshape(1, C).astype(jnp.float32)

    out = pl.pallas_call(
        functools.partial(_grn_kernel, eps=eps),
        out_shape=jax.ShapeDtypeStruct((B, HW, C), x.dtype),
        grid_spec=pltpu.PrefetchScalarGridSpec(
            num_scalar_prefetch=0,
            grid=(B,),
            in_specs=[
                pl.BlockSpec((1, C), lambda i: (0, 0)),        # gamma (resident)
                pl.BlockSpec((1, C), lambda i: (0, 0)),        # beta  (resident)
                pl.BlockSpec((1, HW, C), lambda i: (i, 0, 0)),  # x block = 1 sample
            ],
            out_specs=pl.BlockSpec((1, HW, C), lambda i: (i, 0, 0)),
        ),
        compiler_params=pltpu.CompilerParams(
            dimension_semantics=("parallel",)),
    )(g, b, xr)

    return out.reshape(B, H, W, C)


class GRN:
    """Stateless JAX version of the PyTorch GRN module (NHWC, channels-last)."""

    def __init__(self, dim, gamma=None, beta=None):
        self.dim = dim
        self.gamma = (jnp.zeros((1, 1, 1, dim), jnp.float32)
                      if gamma is None else jnp.asarray(gamma))
        self.beta = (jnp.zeros((1, 1, 1, dim), jnp.float32)
                     if beta is None else jnp.asarray(beta))

    def __call__(self, x):
        return grn_pallas(x, self.gamma, self.beta)


def _grn_reference(x, gamma, beta, eps=1e-6):
    """Pure-JAX reference that mirrors the PyTorch forward exactly."""
    gx = jnp.sqrt(jnp.sum(x.astype(jnp.float32) ** 2, axis=(1, 2), keepdims=True))
    nx = gx / (jnp.mean(gx, axis=-1, keepdims=True) + eps)
    return gamma * (x * nx) + beta + x


if __name__ == "__main__":
    root = jax.random.PRNGKey(0)
    k_x, k_g, k_b = jax.random.split(root, 3)

    # Small shapes consistent with the module: batch=2, spatial=16x16, dim=32.
    B, H, W, C = 2, 16, 16, 32
    x = jax.random.normal(k_x, (B, H, W, C), dtype=jnp.float32)

    # Non-trivial gamma/beta so the test exercises the full formula
    # (the module itself initializes them to zeros).
    gamma = jax.random.normal(k_g, (1, 1, 1, C), dtype=jnp.float32)
    beta = jax.random.normal(k_b, (1, 1, 1, C), dtype=jnp.float32)

    module = GRN(C, gamma=gamma, beta=beta)
    y = module(x)
    jax.block_until_ready(y)

    y_ref = _grn_reference(x, gamma, beta)
    assert y.shape == x.shape and y.dtype == x.dtype
    assert jnp.allclose(y, y_ref, atol=1e-5, rtol=1e-5), (
        float(jnp.max(jnp.abs(y - y_ref))))

    # Default-initialized module (gamma = beta = 0) must be the identity.
    y_id = GRN(C)(x)
    jax.block_until_ready(y_id)
    assert jnp.allclose(y_id, x, atol=1e-6, rtol=1e-6)

    print("KERNEL_OK")
</pallas_src>

<mosaic_0001>
module attributes {stable_mosaic.version = 11 : i64} {
  func.func @_grn_kernel(%arg0: i32, %arg1: memref<1x32xf32, #tpu.memory_space<vmem>>, %arg2: memref<1x32xf32, #tpu.memory_space<vmem>>, %arg3: memref<1x256x32xf32, #tpu.memory_space<vmem>>, %arg4: memref<1x256x32xf32, #tpu.memory_space<vmem>>) attributes {dimension_semantics = [#tpu.dimension_semantics<parallel>], iteration_bounds = array<i64: 2>, scalar_prefetch = 0 : i64, scratch_operands = 0 : i64, tpu.core_type = #tpu.core_type<tc>, window_params = [{pipeline_mode = #tpu.pipeline_mode<synchronous>, transform_indices = @transform_0, window_bounds = array<i64: 1, 32>}, {pipeline_mode = #tpu.pipeline_mode<synchronous>, transform_indices = @transform_1, window_bounds = array<i64: 1, 32>}, {transform_indices = @transform_2, window_bounds = array<i64: 1, 256, 32>}, {transform_indices = @transform_3, window_bounds = array<i64: 1, 256, 32>}]} {
    %c0 = arith.constant 0 : index
    %c0_0 = arith.constant 0 : index
    %c0_1 = arith.constant 0 : index
    %0 = vector.load %arg3[%c0, %c0_0, %c0_1] : memref<1x256x32xf32, #tpu.memory_space<vmem>>, vector<1x256x32xf32>
    %1 = arith.mulf %0, %0 : vector<1x256x32xf32>
    %cst = arith.constant dense<0.000000e+00> : vector<1x32xf32>
    %2 = vector.multi_reduction <add>, %1, %cst [1] : vector<1x256x32xf32> to vector<1x32xf32>
    %3 = vector.shape_cast %2 : vector<1x32xf32> to vector<1x1x32xf32>
    %4 = math.sqrt %3 : vector<1x1x32xf32>
    %cst_2 = arith.constant dense<0.000000e+00> : vector<1x1xf32>
    %5 = vector.multi_reduction <add>, %4, %cst_2 [2] : vector<1x1x32xf32> to vector<1x1xf32>
    %6 = vector.shape_cast %5 : vector<1x1xf32> to vector<1x1x1xf32>
    %cst_3 = arith.constant 3.200000e+01 : f32
    %7 = vector.broadcast %cst_3 : f32 to vector<1x1x1xf32>
    %8 = arith.divf %6, %7 : vector<1x1x1xf32>
    %cst_4 = arith.constant 9.99999997E-7 : f32
    %9 = vector.broadcast %cst_4 : f32 to vector<1x1x1xf32>
    %10 = arith.addf %8, %9 : vector<1x1x1xf32>
    %11 = vector.broadcast %10 : vector<1x1x1xf32> to vector<1x1x32xf32>
    %12 = arith.divf %4, %11 : vector<1x1x32xf32>
    %c0_5 = arith.constant 0 : index
    %c0_6 = arith.constant 0 : index
    %13 = vector.load %arg1[%c0_5, %c0_6] : memref<1x32xf32, #tpu.memory_space<vmem>>, vector<1x32xf32>
    %14 = vector.shape_cast %13 : vector<1x32xf32> to vector<1x1x32xf32>
    %c0_7 = arith.constant 0 : index
    %c0_8 = arith.constant 0 : index
    %15 = vector.load %arg2[%c0_7, %c0_8] : memref<1x32xf32, #tpu.memory_space<vmem>>, vector<1x32xf32>
    %16 = vector.shape_cast %15 : vector<1x32xf32> to vector<1x1x32xf32>
    %17 = vector.broadcast %12 : vector<1x1x32xf32> to vector<1x256x32xf32>
    %18 = arith.mulf %0, %17 : vector<1x256x32xf32>
    %19 = vector.broadcast %14 : vector<1x1x32xf32> to vector<1x256x32xf32>
    %20 = arith.mulf %19, %18 : vector<1x256x32xf32>
    %21 = vector.broadcast %16 : vector<1x1x32xf32> to vector<1x256x32xf32>
    %22 = arith.addf %20, %21 : vector<1x256x32xf32>
    %23 = arith.addf %22, %0 : vector<1x256x32xf32>
    %c0_9 = arith.constant 0 : index
    %c0_10 = arith.constant 0 : index
    %c0_11 = arith.constant 0 : index
    %24 = vector.load %arg4[%c0_9, %c0_10, %c0_11] : memref<1x256x32xf32, #tpu.memory_space<vmem>>, vector<1x256x32xf32>
    tpu.vector_store %arg4[%c0_9, %c0_10, %c0_11], %23 {strides = array<i32>} : memref<1x256x32xf32, #tpu.memory_space<vmem>>, vector<1x256x32xf32>,
    return
  }
  func.func @transform_0(%arg0: i32) -> (i32, i32) {
    %c0_i32 = arith.constant 0 : i32
    %c0_i32_0 = arith.constant 0 : i32
    %c0_i32_1 = arith.constant 0 : i32
    return %c0_i32, %c0_i32_0 : i32, i32
  }
  func.func @transform_1(%arg0: i32) -> (i32, i32) {
    %c0_i32 = arith.constant 0 : i32
    %c0_i32_0 = arith.constant 0 : i32
    %c0_i32_1 = arith.constant 0 : i32
    return %c0_i32, %c0_i32_0 : i32, i32
  }
  func.func @transform_2(%arg0: i32) -> (i32, i32, i32) {
    %c0_i32 = arith.constant 0 : i32
    %c0_i32_0 = arith.constant 0 : i32
    %c0_i32_1 = arith.constant 0 : i32
    return %arg0, %c0_i32, %c0_i32_0 : i32, i32, i32
  }
  func.func @transform_3(%arg0: i32) -> (i32, i32, i32) {
    %c0_i32 = arith.constant 0 : i32
    %c0_i32_0 = arith.constant 0 : i32
    %c0_i32_1 = arith.constant 0 : i32
    return %arg0, %c0_i32, %c0_i32_0 : i32, i32, i32
  }
}

</mosaic_0001>

<llo_original>
// kernel: tpu_custom_call.1
$region0: #{tpu_custom_call.1}
  #allocation0 [shape = 'u32[]', space=smem, size = 0x4, offset = 0x4, fixed_abs, tag = 'smem constant byte address 0x4 - core index']
  #allocation1 [shape = 'u32[72,128]{1,0:T(1,128)}', space=vmem, size = 0x9000, scoped, tag = 'internal scratch']
  %s0 = inlined_call_operand.vmem [shape: f32[1,32], index: 0, kind: input, shape index: {}]
  %s1 = inlined_call_operand.vmem [shape: f32[1,32], index: 1, kind: input, shape index: {}]
  %s2 = inlined_call_operand.vmem [shape: f32[2,256,32], index: 2, kind: input, shape index: {}]
  %s3 = inlined_call_operand.vmem [shape: f32[2,256,32], index: 3, kind: output, shape index: {}]
  %s4 = sld [smem:[#allocation0]]
  $region45: #{tpu_custom_call.1} parent=0
    _
  %s6 = ssub.s32 1, %s4
  %s7 = scalar_select 0, %s6, %s4
  loop: start=0, step=1, limit=4
  $region2: #{tpu_custom_call.1} parent=0 // loop_pre_header
    _
  $region3: #{tpu_custom_call.1} parent=0 // loop_header
    %s9 = sphi 0, %s13
    %p10 = scmp.ge.s32.totalorder %s9, 4
    %s17 = sphi 0, %s17
    %s19 = sphi 0, %s17
    %s20 = sphi 0, %s19
    %s34 = sphi 0, %s20
    %s38 = sphi 0, %s38
    %s40 = sphi 0, %s38
    %s41 = sphi 0, %s40
    %s55 = sphi 0, %s41
    %s61 = sphi 0, %s63
    %s64 = sphi 0, %s61
    %s65 = sphi 0, %s64
    %s81 = sphi 0, %s65
    %s87 = sphi 0, %s89
    %s90 = sphi 0, %s87
    %s91 = sphi 0, %s90
    %s107 = sphi 0, %s91
  $region4: #{tpu_custom_call.1} parent=0 // loop_header_branch
    %12 = sbr.rel (%p10) target = $region8
  $region5: #{tpu_custom_call.1} parent=0 // loop_body
    %s14 = ssub.s32 %s9, 1
    %s15 = ssub.s32 %s9, 2
    %s16 = sadd.s32 %s9, 1
    %s18 = sadd.s32 %s17, 1
    %p21 = scmp.eq.s32.totalorder %s9, 1
    %p22 = scmp.ne.s32.totalorder %s17, %s19
    %p23 = scmp.eq.s32.totalorder %s9, 0
    %p24 = por %p22, %p23
    %p25 = scmp.ne.s32.totalorder %s17, %s19
    %p26 = scmp.eq.s32.totalorder %s14, 1
    %p27 = por %p25, %p26
    %p28 = scmp.ne.s32.totalorder %s19, %s20
    %p29 = scmp.eq.s32.totalorder %s14, 0
    %p30 = por %p28, %p29
    %p31 = scmp.ne.s32.totalorder %s19, %s20
    %p32 = scmp.eq.s32.totalorder %s15, 1
    %p33 = por %p31, %p32
    %p35 = scmp.ne.s32.totalorder %s20, %s34
    %p36 = scmp.eq.s32.totalorder %s15, 0
    %p37 = por %p35, %p36
    %s39 = sadd.s32 %s38, 1
    %p42 = scmp.eq.s32.totalorder %s9, 1
    %p43 = scmp.ne.s32.totalorder %s38, %s40
    %p44 = scmp.eq.s32.totalorder %s9, 0
    %p45 = por %p43, %p44
    %p46 = scmp.ne.s32.totalorder %s38, %s40
    %p47 = scmp.eq.s32.totalorder %s14, 1
    %p48 = por %p46, %p47
    %p49 = scmp.ne.s32.totalorder %s40, %s41
    %p50 = scmp.eq.s32.totalorder %s14, 0
    %p51 = por %p49, %p50
    %p52 = scmp.ne.s32.totalorder %s40, %s41
    %p53 = scmp.eq.s32.totalorder %s15, 1
    %p54 = por %p52, %p53
    %p56 = scmp.ne.s32.totalorder %s41, %s55
    %p57 = scmp.eq.s32.totalorder %s15, 0
    %p58 = por %p56, %p57
    %s59 = ssub.s32 %s9, %s16
    %p60 = scmp.eq.s32.totalorder %s59, 0
    %s62 = sadd.s32 %s61, 1
    %s63 = scalar_select %p60, %s61, %s62
    %p66 = pneg %p60
    %p67 = scmp.eq.s32.totalorder %s9, 1
    %p68 = por %p66, %p67
    %p69 = scmp.ne.s32.totalorder %s61, %s64
    %p70 = scmp.eq.s32.totalorder %s9, 0
    %p71 = por %p69, %p70
    %p72 = scmp.ne.s32.totalorder %s61, %s64
    %p73 = scmp.eq.s32.totalorder %s14, 1
    %p74 = por %p72, %p73
    %p75 = scmp.ne.s32.totalorder %s64, %s65
    %p76 = scmp.eq.s32.totalorder %s14, 0
    %p77 = por %p75, %p76
    %p78 = scmp.ne.s32.totalorder %s64, %s65
    %p79 = scmp.eq.s32.totalorder %s15, 1
    %p80 = por %p78, %p79
    %p82 = scmp.ne.s32.totalorder %s65, %s81
    %p83 = scmp.eq.s32.totalorder %s15, 0
    %p84 = por %p82, %p83
    %s85 = ssub.s32 %s9, %s16
    %p86 = scmp.eq.s32.totalorder %s85, 0
    %s88 = sadd.s32 %s87, 1
    %s89 = scalar_select %p86, %s87, %s88
    %p92 = pneg %p86
    %p93 = scmp.eq.s32.totalorder %s9, 1
    %p94 = por %p92, %p93
    %p95 = scmp.ne.s32.totalorder %s87, %s90
    %p96 = scmp.eq.s32.totalorder %s9, 0
    %p97 = por %p95, %p96
    %p98 = scmp.ne.s32.totalorder %s87, %s90
    %p99 = scmp.eq.s32.totalorder %s14, 1
    %p100 = por %p98, %p99
    %p101 = scmp.ne.s32.totalorder %s90, %s91
    %p102 = scmp.eq.s32.totalorder %s14, 0
    %p103 = por %p101, %p102
    %p104 = scmp.ne.s32.totalorder %s90, %s91
    %p105 = scmp.eq.s32.totalorder %s15, 1
    %p106 = por %p104, %p105
    %p108 = scmp.ne.s32.totalorder %s91, %s107
    %p109 = scmp.eq.s32.totalorder %s15, 0
    %p110 = por %p108, %p109
    %p111 = scmp.le.s32.totalorder 1, %s9
    %p112 = scmp.lt.s32.totalorder %s9, 3
    %p113 = pnand %p111, %p112
    %p114 = pneg %p113
    // Predicated region
    $region9: #{tpu_custom_call.1} parent=5 // pred_check
      _
    $region10: #{tpu_custom_call.1} parent=5 // pred_check_branch
      %116 = sbr.rel (%p113) target = $region12
    $region11: #{tpu_custom_call.1} parent=5 // pred_region
      %s117 = ssub.s32 %s9, 1
      // Predicated region
      $region13: #{tpu_custom_call.1} parent=11 // pred_check
        %p118 = pneg %p30
      $region14: #{tpu_custom_call.1} parent=11 // pred_check_branch
        %120 = sbr.rel (%p118) target = $region16
      $region15: #{tpu_custom_call.1} parent=11 // pred_region
        _
      $region16: #{tpu_custom_call.1} parent=11 // pred_fallthru
        _
      // Predicated region
      $region17: #{tpu_custom_call.1} parent=11 // pred_check
        %p121 = pneg %p51
      $region18: #{tpu_custom_call.1} parent=11 // pred_check_branch
        %123 = sbr.rel (%p121) target = $region20
      $region19: #{tpu_custom_call.1} parent=11 // pred_region
        _
      $region20: #{tpu_custom_call.1} parent=11 // pred_fallthru
        _
    $region12: #{tpu_custom_call.1} parent=5 // pred_fallthru
      _
    %p124 = scmp.lt.s32.totalorder %s9, 2
    // Predicated region
    $region21: #{tpu_custom_call.1} parent=5 // pred_check
      %p125 = pneg %p124
    $region22: #{tpu_custom_call.1} parent=5 // pred_check_branch
      %127 = sbr.rel (%p125) target = $region24
    $region23: #{tpu_custom_call.1} parent=5 // pred_region
      // Predicated region
      $region25: #{tpu_custom_call.1} parent=23 // pred_check
        %p128 = pneg %p71
      $region26: #{tpu_custom_call.1} parent=23 // pred_check_branch
        %130 = sbr.rel (%p128) target = $region28
      $region27: #{tpu_custom_call.1} parent=23 // pred_region
        %p131 = scmp.lt.s32.totalorder %s9, 1
        %s132 = scalar_select %p131, %s9, 1
        %s133 = smul.addr %s132, 32
        %s134 = smul.addr %s133, 8
        %s135 = scalar_lea.vmem %s2, %s134
      $region28: #{tpu_custom_call.1} parent=23 // pred_fallthru
        _
    $region24: #{tpu_custom_call.1} parent=5 // pred_fallthru
      _
    %p136 = scmp.le.s32.totalorder 1, %s9
    %p137 = scmp.lt.s32.totalorder %s9, 3
    %p138 = pnand %p136, %p137
    %p139 = pneg %p138
    // Predicated region
    $region29: #{tpu_custom_call.1} parent=5 // pred_check
      _
    $region30: #{tpu_custom_call.1} parent=5 // pred_check_branch
      %141 = sbr.rel (%p138) target = $region32
    $region31: #{tpu_custom_call.1} parent=5 // pred_region
      %s142 = ssub.s32 %s9, 1
      %p143 = pneg %p30
      %p144 = pneg %p27
      %p145 = pneg %p51
      %p146 = pneg %p48
      %p147 = scmp.lt.s32.totalorder %s14, 1
      %s148 = scalar_select %p147, %s14, 1
      %s149 = smul.addr %s148, 32
      %s150 = smul.addr %s149, 8
      %s151 = scalar_lea.vmem %s2, %s150
      %p152 = pneg %p77
      %p153 = pneg %p74
      %p154 = pneg %p103
      %p155 = pneg %p100
      %p156 = scmp.lt.s32.totalorder %s14, 1
      %s157 = scalar_select %p156, %s14, 1
      %s158 = smul.addr %s157, 32
      %s159 = smul.addr %s158, 8
      %s160 = scalar_lea.vmem %s3, %s159
      %p161 = scmp.lt.s32.totalorder %s14, 1
      %s162 = scalar_select %p161, %s14, 1
      %s163 = smul.addr %s162, 32
      %s164 = smul.addr %s163, 8
      %s165 = scalar_lea.vmem %s2, %s164
      %p166 = scmp.lt.s32.totalorder %s14, 1
      %s167 = scalar_select %p166, %s14, 1
      %s168 = smul.addr %s167, 32
      %s169 = smul.addr %s168, 8
      %s170 = scalar_lea.vmem %s3, %s169
      %v171 = vld [vmem:[%s165] sm:$0xff]
      %v172 = vld [vmem:[%s165 + $0x8] sm:$0xff]
      %v173 = vld [vmem:[%s165 + $0x10] sm:$0xff]
      %v174 = vld [vmem:[%s165 + $0x18] sm:$0xff]
      %v175 = vld [vmem:[%s165 + $0x20] sm:$0xff]
      %v176 = vld [vmem:[%s165 + $0x28] sm:$0xff]
      %v177 = vld [vmem:[%s165 + $0x30] sm:$0xff]
      %v178 = vld [vmem:[%s165 + $0x38] sm:$0xff]
      %v179 = vld [vmem:[%s165 + $0x40] sm:$0xff]
      %v180 = vld [vmem:[%s165 + $0x48] sm:$0xff]
      %v181 = vld [vmem:[%s165 + $0x50] sm:$0xff]
      %v182 = vld [vmem:[%s165 + $0x58] sm:$0xff]
      %v183 = vld [vmem:[%s165 + $0x60] sm:$0xff]
      %v184 = vld [vmem:[%s165 + $0x68] sm:$0xff]
      %v185 = vld [vmem:[%s165 + $0x70] sm:$0xff]
      %v186 = vld [vmem:[%s165 + $0x78] sm:$0xff]
      %v187 = vld [vmem:[%s165 + $0x80] sm:$0xff]
      %v188 = vld [vmem:[%s165 + $0x88] sm:$0xff]
      %v189 = vld [vmem:[%s165 + $0x90] sm:$0xff]
      %v190 = vld [vmem:[%s165 + $0x98] sm:$0xff]
      %v191 = vld [vmem:[%s165 + $0xa0] sm:$0xff]
      %v192 = vld [vmem:[%s165 + $0xa8] sm:$0xff]
      %v193 = vld [vmem:[%s165 + $0xb0] sm:$0xff]
      %v194 = vld [vmem:[%s165 + $0xb8] sm:$0xff]
      %v195 = vld [vmem:[%s165 + $0xc0] sm:$0xff]
      %v196 = vld [vmem:[%s165 + $0xc8] sm:$0xff]
      %v197 = vld [vmem:[%s165 + $0xd0] sm:$0xff]
      %v198 = vld [vmem:[%s165 + $0xd8] sm:$0xff]
      %v199 = vld [vmem:[%s165 + $0xe0] sm:$0xff]
      %v200 = vld [vmem:[%s165 + $0xe8] sm:$0xff]
      %v201 = vld [vmem:[%s165 + $0xf0] sm:$0xff]
      %v202 = vld [vmem:[%s165 + $0xf8] sm:$0xff]
      %v203 = vmul.f32 %v171, %v171
      %v204 = vmul.f32 %v172, %v172
      %v205 = vmul.f32 %v173, %v173
      %v206 = vmul.f32 %v174, %v174
      %v207 = vmul.f32 %v175, %v175
      %v208 = vmul.f32 %v176, %v176
      %v209 = vmul.f32 %v177, %v177
      %v210 = vmul.f32 %v178, %v178
      %v211 = vmul.f32 %v179, %v179
      %v212 = vmul.f32 %v180, %v180
      %v213 = vmul.f32 %v181, %v181
      %v214 = vmul.f32 %v182, %v182
      %v215 = vmul.f32 %v183, %v183
      %v216 = vmul.f32 %v184, %v184
      %v217 = vmul.f32 %v185, %v185
      %v218 = vmul.f32 %v186, %v186
      %v219 = vmul.f32 %v187, %v187
      %v220 = vmul.f32 %v188, %v188
      %v221 = vmul.f32 %v189, %v189
      %v222 = vmul.f32 %v190, %v190
      %v223 = vmul.f32 %v191, %v191
      %v224 = vmul.f32 %v192, %v192
      %v225 = vmul.f32 %v193, %v193
      %v226 = vmul.f32 %v194, %v194
      %v227 = vmul.f32 %v195, %v195
      %v228 = vmul.f32 %v196, %v196
      %v229 = vmul.f32 %v197, %v197
      %v230 = vmul.f32 %v198, %v198
      %v231 = vmul.f32 %v199, %v199
      %v232 = vmul.f32 %v200, %v200
      %v233 = vmul.f32 %v201, %v201
      %v234 = vmul.f32 %v202, %v202
      %vm235 = vcmask 261120
      %v236 = vsel %vm235, %v203, 0.0
      %v237 = vsel %vm235, %v204, 0.0
      %v238 = vadd.f32 %v236, %v237
      %v239 = vsel %vm235, %v205, 0.0
      %v240 = vadd.f32 %v238, %v239
      %v241 = vsel %vm235, %v206, 0.0
      %v242 = vadd.f32 %v240, %v241
      %v243 = vsel %vm235, %v207, 0.0
      %v244 = vadd.f32 %v242, %v243
      %v245 = vsel %vm235, %v208, 0.0
      %v246 = vadd.f32 %v244, %v245
      %v247 = vsel %vm235, %v209, 0.0
      %v248 = vadd.f32 %v246, %v247
      %v249 = vsel %vm235, %v210, 0.0
      %v250 = vadd.f32 %v248, %v249
      %v251 = vsel %vm235, %v211, 0.0
      %v252 = vadd.f32 %v250, %v251
      %v253 = vsel %vm235, %v212, 0.0
      %v254 = vadd.f32 %v252, %v253
      %v255 = vsel %vm235, %v213, 0.0
      %v256 = vadd.f32 %v254, %v255
      %v257 = vsel %vm235, %v214, 0.0
      %v258 = vadd.f32 %v256, %v257
      %v259 = vsel %vm235, %v215, 0.0
      %v260 = vadd.f32 %v258, %v259
      %v261 = vsel %vm235, %v216, 0.0
      %v262 = vadd.f32 %v260, %v261
      %v263 = vsel %vm235, %v217, 0.0
      %v264 = vadd.f32 %v262, %v263
      %v265 = vsel %vm235, %v218, 0.0
      %v266 = vadd.f32 %v264, %v265
      %v267 = vsel %vm235, %v219, 0.0
      %v268 = vadd.f32 %v266, %v267
      %v269 = vsel %vm235, %v220, 0.0
      %v270 = vadd.f32 %v268, %v269
      %v271 = vsel %vm235, %v221, 0.0
      %v272 = vadd.f32 %v270, %v271
      %v273 = vsel %vm235, %v222, 0.0
      %v274 = vadd.f32 %v272, %v273
      %v275 = vsel %vm235, %v223, 0.0
      %v276 = vadd.f32 %v274, %v275
      %v277 = vsel %vm235, %v224, 0.0
      %v278 = vadd.f32 %v276, %v277
      %v279 = vsel %vm235, %v225, 0.0
      %v280 = vadd.f32 %v278, %v279
      %v281 = vsel %vm235, %v226, 0.0
      %v282 = vadd.f32 %v280, %v281
      %v283 = vsel %vm235, %v227, 0.0
      %v284 = vadd.f32 %v282, %v283
      %v285 = vsel %vm235, %v228, 0.0
      %v286 = vadd.f32 %v284, %v285
      %v287 = vsel %vm235, %v229, 0.0
      %v288 = vadd.f32 %v286, %v287
      %v289 = vsel %vm235, %v230, 0.0
      %v290 = vadd.f32 %v288, %v289
      %v291 = vsel %vm235, %v231, 0.0
      %v292 = vadd.f32 %v290, %v291
      %v293 = vsel %vm235, %v232, 0.0
      %v294 = vadd.f32 %v292, %v293
      %v295 = vsel %vm235, %v233, 0.0
      %v296 = vadd.f32 %v294, %v295
      %v297 = vsel %vm235, %v234, 0.0
      %v298 = vadd.f32 %v296, %v297
      %v299 = vrot.slane %v298, 4
      %v300 = vadd.f32 %v298, %v299
      %v301 = vrot.slane %v300, 2
      %v302 = vadd.f32 %v300, %v301
      %v303 = vrot.slane %v302, 1
      %v304 = vadd.f32 %v302, %v303
      %v305 = vrsqrt.pop %v304
      %v306 = vmul.f32 %v305, %v304
      %v307 = vmul.f32 %v306, %v305
      %v308 = vmul.f32 0.5, %v307
      %v309 = vsub.f32 1.5, %v308
      %v310 = vmul.f32 %v305, %v309
      %v311 = vmul.f32 %v304, %v310
      %vm312 = vcmp.eq.f32.partialorder %v304, inf
      %v313 = vsel %vm312, %v304, %v311
      %vm314 = vcmp.eq.f32.partialorder %v304, 0.0
      %v315 = vand.u32 %v304, 2147483648
      %v316 = vsel %vm314, %v315, %v313
      %v317 = vsel %vm235, %v316, 0.0
      %318 = vadd.xlane.f32.xlu0 %v317
      %v319 = vpop.xlane.xlu0 %318
      %v320 = vrcp.pop 32.0
      %v321 = vmul.f32 32.0, %v320
      %v322 = vsub.f32 1.0, %v321
      %v323 = vmul.f32 %v320, %v322
      %v324 = vadd.f32 %v320, %v323
      %vm325 = vweird.f32 %v320
      %v326 = vsel %vm325, %v320, %v324
      %v327 = vmul.f32 %v319, %v326
      %v328 = vadd.f32 %v327, 1e-06
      %v329 = vrcp.pop %v328
      %v330 = vmul.f32 %v328, %v329
      %v331 = vsub.f32 1.0, %v330
      %v332 = vmul.f32 %v329, %v331
      %v333 = vadd.f32 %v329, %v332
      %vm334 = vweird.f32 %v328
      %vm335 = vweird.f32 %v329
      %vm336 = vmor %vm334, %vm335
      %v337 = vsel %vm336, %v329, %v333
      %v338 = vand.u32 2147483647, %v328
      %vm339 = vcmp.eq.f32.partialorder %v338, 8.507059e+37
      %v340 = vand.u32 %v328, 2147483648
      %v341 = vor.u32 1.1754944e-38, %v340
      %v342 = vsel %vm339, %v341, %v337
      %v343 = vmul.f32 %v316, %v342
      %v344 = vld [vmem:[%s0] sm:$0x1]
      %v345 = vld [vmem:[%s1] sm:$0x1]
      %v346 = vmul.f32 %v171, %v343
      %v347 = vmul.f32 %v172, %v343
      %v348 = vmul.f32 %v173, %v343
      %v349 = vmul.f32 %v174, %v343
      %v350 = vmul.f32 %v175, %v343
      %v351 = vmul.f32 %v176, %v343
      %v352 = vmul.f32 %v177, %v343
      %v353 = vmul.f32 %v178, %v343
      %v354 = vmul.f32 %v179, %v343
      %v355 = vmul.f32 %v180, %v343
      %v356 = vmul.f32 %v181, %v343
      %v357 = vmul.f32 %v182, %v343
      %v358 = vmul.f32 %v183, %v343
      %v359 = vmul.f32 %v184, %v343
      %v360 = vmul.f32 %v185, %v343
      %v361 = vmul.f32 %v186, %v343
      %v362 = vmul.f32 %v187, %v343
      %v363 = vmul.f32 %v188, %v343
      %v364 = vmul.f32 %v189, %v343
      %v365 = vmul.f32 %v190, %v343
      %v366 = vmul.f32 %v191, %v343
      %v367 = vmul.f32 %v192, %v343
      %v368 = vmul.f32 %v193, %v343
      %v369 = vmul.f32 %v194, %v343
      %v370 = vmul.f32 %v195, %v343
      %v371 = vmul.f32 %v196, %v343
      %v372 = vmul.f32 %v197, %v343
      %v373 = vmul.f32 %v198, %v343
      %v374 = vmul.f32 %v199, %v343
      %v375 = vmul.f32 %v200, %v343
      %v376 = vmul.f32 %v201, %v343
      %v377 = vmul.f32 %v202, %v343
      %v379 = vperm.slane %v344, 0
      %v381 = vmul.f32 %v379, %v346
      %v382 = vmul.f32 %v379, %v347
      %v383 = vmul.f32 %v379, %v348
      %v384 = vmul.f32 %v379, %v349
      %v385 = vmul.f32 %v379, %v350
      %v386 = vmul.f32 %v379, %v351
      %v387 = vmul.f32 %v379, %v352
      %v388 = vmul.f32 %v379, %v353
      %v389 = vmul.f32 %v379, %v354
      %v390 = vmul.f32 %v379, %v355
      %v391 = vmul.f32 %v379, %v356
      %v392 = vmul.f32 %v379, %v357
      %v393 = vmul.f32 %v379, %v358
      %v394 = vmul.f32 %v379, %v359
      %v395 = vmul.f32 %v379, %v360
      %v396 = vmul.f32 %v379, %v361
      %v397 = vmul.f32 %v379, %v362
      %v398 = vmul.f32 %v379, %v363
      %v399 = vmul.f32 %v379, %v364
      %v400 = vmul.f32 %v379, %v365
      %v401 = vmul.f32 %v379, %v366
      %v402 = vmul.f32 %v379, %v367
      %v403 = vmul.f32 %v379, %v368
      %v404 = vmul.f32 %v379, %v369
      %v405 = vmul.f32 %v379, %v370
      %v406 = vmul.f32 %v379, %v371
      %v407 = vmul.f32 %v379, %v372
      %v408 = vmul.f32 %v379, %v373
      %v409 = vmul.f32 %v379, %v374
      %v410 = vmul.f32 %v379, %v375
      %v411 = vmul.f32 %v379, %v376
      %v412 = vmul.f32 %v379, %v377
      %v414 = vperm.slane %v345, 0
      %v416 = vadd.f32 %v381, %v414
      %v417 = vadd.f32 %v382, %v414
      %v418 = vadd.f32 %v383, %v414
      %v419 = vadd.f32 %v384, %v414
      %v420 = vadd.f32 %v385, %v414
      %v421 = vadd.f32 %v386, %v414
      %v422 = vadd.f32 %v387, %v414
      %v423 = vadd.f32 %v388, %v414
      %v424 = vadd.f32 %v389, %v414
      %v425 = vadd.f32 %v390, %v414
      %v426 = vadd.f32 %v391, %v414
      %v427 = vadd.f32 %v392, %v414
      %v428 = vadd.f32 %v393, %v414
      %v429 = vadd.f32 %v394, %v414
      %v430 = vadd.f32 %v395, %v414
      %v431 = vadd.f32 %v396, %v414
      %v432 = vadd.f32 %v397, %v414
      %v433 = vadd.f32 %v398, %v414
      %v434 = vadd.f32 %v399, %v414
      %v435 = vadd.f32 %v400, %v414
      %v436 = vadd.f32 %v401, %v414
      %v437 = vadd.f32 %v402, %v414
      %v438 = vadd.f32 %v403, %v414
      %v439 = vadd.f32 %v404, %v414
      %v440 = vadd.f32 %v405, %v414
      %v441 = vadd.f32 %v406, %v414
      %v442 = vadd.f32 %v407, %v414
      %v443 = vadd.f32 %v408, %v414
      %v444 = vadd.f32 %v409, %v414
      %v445 = vadd.f32 %v410, %v414
      %v446 = vadd.f32 %v411, %v414
      %v447 = vadd.f32 %v412, %v414
      %v448 = vadd.f32 %v416, %v171
      %v449 = vadd.f32 %v417, %v172
      %v450 = vadd.f32 %v418, %v173
      %v451 = vadd.f32 %v419, %v174
      %v452 = vadd.f32 %v420, %v175
      %v453 = vadd.f32 %v421, %v176
      %v454 = vadd.f32 %v422, %v177
      %v455 = vadd.f32 %v423, %v178
      %v456 = vadd.f32 %v424, %v179
      %v457 = vadd.f32 %v425, %v180
      %v458 = vadd.f32 %v426, %v181
      %v459 = vadd.f32 %v427, %v182
      %v460 = vadd.f32 %v428, %v183
      %v461 = vadd.f32 %v429, %v184
      %v462 = vadd.f32 %v430, %v185
      %v463 = vadd.f32 %v431, %v186
      %v464 = vadd.f32 %v432, %v187
      %v465 = vadd.f32 %v433, %v188
      %v466 = vadd.f32 %v434, %v189
      %v467 = vadd.f32 %v435, %v190
      %v468 = vadd.f32 %v436, %v191
      %v469 = vadd.f32 %v437, %v192
      %v470 = vadd.f32 %v438, %v193
      %v471 = vadd.f32 %v439, %v194
      %v472 = vadd.f32 %v440, %v195
      %v473 = vadd.f32 %v441, %v196
      %v474 = vadd.f32 %v442, %v197
      %v475 = vadd.f32 %v443, %v198
      %v476 = vadd.f32 %v444, %v199
      %v477 = vadd.f32 %v445, %v200
      %v478 = vadd.f32 %v446, %v201
      %v479 = vadd.f32 %v447, %v202
      %480 = vst.msk [vmem:[%s170] sm:$0xff] %vm235, %v448
      %481 = vst.msk [vmem:[%s170 + $0x8] sm:$0xff] %vm235, %v449
      %482 = vst.msk [vmem:[%s170 + $0x10] sm:$0xff] %vm235, %v450
      %483 = vst.msk [vmem:[%s170 + $0x18] sm:$0xff] %vm235, %v451
      %484 = vst.msk [vmem:[%s170 + $0x20] sm:$0xff] %vm235, %v452
      %485 = vst.msk [vmem:[%s170 + $0x28] sm:$0xff] %vm235, %v453
      %486 = vst.msk [vmem:[%s170 + $0x30] sm:$0xff] %vm235, %v454
      %487 = vst.msk [vmem:[%s170 + $0x38] sm:$0xff] %vm235, %v455
      %488 = vst.msk [vmem:[%s170 + $0x40] sm:$0xff] %vm235, %v456
      %489 = vst.msk [vmem:[%s170 + $0x48] sm:$0xff] %vm235, %v457
      %490 = vst.msk [vmem:[%s170 + $0x50] sm:$0xff] %vm235, %v458
      %491 = vst.msk [vmem:[%s170 + $0x58] sm:$0xff] %vm235, %v459
      %492 = vst.msk [vmem:[%s170 + $0x60] sm:$0xff] %vm235, %v460
      %493 = vst.msk [vmem:[%s170 + $0x68] sm:$0xff] %vm235, %v461
      %494 = vst.msk [vmem:[%s170 + $0x70] sm:$0xff] %vm235, %v462
      %495 = vst.msk [vmem:[%s170 + $0x78] sm:$0xff] %vm235, %v463
      %496 = vst.msk [vmem:[%s170 + $0x80] sm:$0xff] %vm235, %v464
      %497 = vst.msk [vmem:[%s170 + $0x88] sm:$0xff] %vm235, %v465
      %498 = vst.msk [vmem:[%s170 + $0x90] sm:$0xff] %vm235, %v466
      %499 = vst.msk [vmem:[%s170 + $0x98] sm:$0xff] %vm235, %v467
      %500 = vst.msk [vmem:[%s170 + $0xa0] sm:$0xff] %vm235, %v468
      %501 = vst.msk [vmem:[%s170 + $0xa8] sm:$0xff] %vm235, %v469
      %502 = vst.msk [vmem:[%s170 + $0xb0] sm:$0xff] %vm235, %v470
      %503 = vst.msk [vmem:[%s170 + $0xb8] sm:$0xff] %vm235, %v471
      %504 = vst.msk [vmem:[%s170 + $0xc0] sm:$0xff] %vm235, %v472
      %505 = vst.msk [vmem:[%s170 + $0xc8] sm:$0xff] %vm235, %v473
      %506 = vst.msk [vmem:[%s170 + $0xd0] sm:$0xff] %vm235, %v474
      %507 = vst.msk [vmem:[%s170 + $0xd8] sm:$0xff] %vm235, %v475
      %508 = vst.msk [vmem:[%s170 + $0xe0] sm:$0xff] %vm235, %v476
      %509 = vst.msk [vmem:[%s170 + $0xe8] sm:$0xff] %vm235, %v477
      %510 = vst.msk [vmem:[%s170 + $0xf0] sm:$0xff] %vm235, %v478
      %511 = vst.msk [vmem:[%s170 + $0xf8] sm:$0xff] %vm235, %v479
      %p512 = scmp.lt.s32.totalorder %s14, 1
      %s513 = scalar_select %p512, %s14, 1
      %s514 = smul.addr %s513, 32
      %s515 = smul.addr %s514, 8
      %s516 = scalar_lea.vmem %s3, %s515
      // Predicated region
      $region33: #{tpu_custom_call.1} parent=31 // pred_check
        %p517 = pneg %p100
      $region34: #{tpu_custom_call.1} parent=31 // pred_check_branch
        %519 = sbr.rel (%p517) target = $region36
      $region35: #{tpu_custom_call.1} parent=31 // pred_region
        _
      $region36: #{tpu_custom_call.1} parent=31 // pred_fallthru
        _
    $region32: #{tpu_custom_call.1} parent=5 // pred_fallthru
      _
    %p520 = scmp.le.s32.totalorder 2, %s9
    // Predicated region
    $region37: #{tpu_custom_call.1} parent=5 // pred_check
      %p521 = pneg %p520
    $region38: #{tpu_custom_call.1} parent=5 // pred_check_branch
      %523 = sbr.rel (%p521) target = $region40
    $region39: #{tpu_custom_call.1} parent=5 // pred_region
      %s524 = ssub.s32 %s9, 2
      // Predicated region
      $region41: #{tpu_custom_call.1} parent=39 // pred_check
        %p525 = pneg %p106
      $region42: #{tpu_custom_call.1} parent=39 // pred_check_branch
        %527 = sbr.rel (%p525) target = $region44
      $region43: #{tpu_custom_call.1} parent=39 // pred_region
        %p528 = scmp.lt.s32.totalorder %s15, 1
        %s529 = scalar_select %p528, %s15, 1
        %s530 = smul.addr %s529, 32
        %s531 = smul.addr %s530, 8
        %s532 = scalar_lea.vmem %s3, %s531
      $region44: #{tpu_custom_call.1} parent=39 // pred_fallthru
        _
    $region40: #{tpu_custom_call.1} parent=5 // pred_fallthru
      _
  $region6: #{tpu_custom_call.1} parent=0 // loop_footer
    %s13 = sadd.s32 1, %s9
  $region7: #{tpu_custom_call.1} parent=0 // loop_footer_branch
    %8 = sbr.rel target = $region3
  $region8: #{tpu_custom_call.1} parent=0 // loop_exit
    _

</llo_original>
